<compile_context>
chip_gen: v6e
topology: v6e:2x2x1
jax: 0.10.0
libtpu: 0.0.40
codegen_flags: <defaults>
</compile_context>

<pallas_src>
import functools
import math

import jax
import jax.numpy as jnp
from jax import lax
from jax.experimental import pallas as pl
from jax.experimental.pallas import tpu as pltpu

_LANE = 128
_MAX_TILE_HW = 2048   # blocks past ~1-2 MiB are already at the HBM-roofline plateau
_MAX_NB = 8           # static per-step sample unroll cap


def _round_up(x, m):
    return ((x + m - 1) // m) * m


def _vmem_limits():
    """Generation-aware VMEM block budget + scoped-VMEM limit."""
    cap = 64 * 1024 * 1024
    try:
        info = pltpu.get_tpu_info()
        cap = int(getattr(info, "vmem_capacity_bytes", cap) or cap)
    except Exception:
        pass
    # v7x (64 MiB physical): keep <= 48 MiB scoped; v5e/v6e (128 MiB): <= 96 MiB.
    limit = int(min((cap * 3) // 4, 96 * 1024 * 1024))
    budget = int(min(limit // 2, 24 * 1024 * 1024))
    return budget, limit


def _choose_tiles(N, C, HW, in_itemsize, budget_bytes):
    """Pick (Nb, tile_hw): lane tile + per-step sample batching under the budget."""
    hw_lane = _round_up(max(HW, 1), _LANE)
    # Honest per-(column, sample) estimate: double-buffered input DMAs
    # (logits + int32 target) + ~4 f32 in-kernel temporaries over the (C, tile)
    # plane + the lane-wise f32 accumulators.
    bytes_per_col = 2 * (C * in_itemsize + 4) + 4 * C * 4 + 2 * 4
    cols_budget = budget_bytes // bytes_per_col
    if cols_budget < _LANE:
        # TODO(synk): tile the class axis with an online logsumexp instead of
        # carrying the full C per block (needed for vocabulary-sized C on v7x).
        raise NotImplementedError(
            f"C={C} too large for a full-class VMEM block on this TPU.")
    tile_hw = int(min(hw_lane, _MAX_TILE_HW, (cols_budget // _LANE) * _LANE))
    nb = 1
    for d in range(min(N, _MAX_NB), 0, -1):
        if N % d == 0 and d * tile_hw <= cols_budget:
            nb = d
            break
    return nb, tile_hw


def _ce_kernel_unweighted(x_ref, t_ref, out_ref, acc_ref, *,
                          nb, with_logits, hw, tile_hw, need_mask):
    s = pl.program_id(1)

    @pl.when(s == 0)
    def _init():
        acc_ref[...] = jnp.zeros_like(acc_ref)

    C = x_ref.shape[1]
    # Hoisted out of the per-sample unroll (grid-invariant within a step).
    cls = lax.broadcasted_iota(jnp.int32, (C, tile_hw), 0)           # (C, T)
    if need_mask:
        col = s * tile_hw + lax.broadcasted_iota(jnp.int32, (1, tile_hw), 1)
        valid = col < hw                                             # (1, T)

    tile_sum = jnp.zeros((1, tile_hw), jnp.float32)
    for i in range(nb):                      # static unroll over batched samples
        x = x_ref[i].astype(jnp.float32)     # (C, T)
        tgt = t_ref[i]                       # (1, T) int32
        onehot = cls == tgt
        picked = jnp.sum(jnp.where(onehot, x, 0.0), axis=0, keepdims=True)
        if with_logits:
            m = jnp.max(x, axis=0, keepdims=True)
            lse = m + jnp.log(jnp.sum(jnp.exp(x - m), axis=0, keepdims=True))
            per_elem = lse - picked          # -log_softmax(x)[target]
        else:
            per_elem = -picked               # NLLLoss on log-probabilities
        if need_mask:
            # Select (not multiply): garbage/NaN boundary columns cannot leak.
            per_elem = jnp.where(valid, per_elem, 0.0)
        tile_sum = tile_sum + per_elem

    acc_ref[...] += tile_sum                 # one lane-wise VMEM RMW per step

    @pl.when(s == pl.num_programs(1) - 1)
    def _finish():
        out_ref[...] = jnp.broadcast_to(jnp.sum(acc_ref[...]), (1, _LANE))


def _ce_kernel_weighted(x_ref, t_ref, w_ref, num_ref, den_ref, acc_ref, wacc_ref, *,
                        nb, with_logits, hw, tile_hw, need_mask):
    s = pl.program_id(1)

    @pl.when(s == 0)
    def _init():
        acc_ref[...] = jnp.zeros_like(acc_ref)
        wacc_ref[...] = jnp.zeros_like(wacc_ref)

    C = x_ref.shape[1]
    cls = lax.broadcasted_iota(jnp.int32, (C, tile_hw), 0)           # (C, T)
    w_plane = jnp.broadcast_to(w_ref[...].astype(jnp.float32), (C, tile_hw))
    if need_mask:
        col = s * tile_hw + lax.broadcasted_iota(jnp.int32, (1, tile_hw), 1)
        valid = col < hw

    loss_sum = jnp.zeros((1, tile_hw), jnp.float32)
    w_sum = jnp.zeros((1, tile_hw), jnp.float32)
    for i in range(nb):
        x = x_ref[i].astype(jnp.float32)     # (C, T)
        tgt = t_ref[i]                       # (1, T)
        onehot = cls == tgt
        picked = jnp.sum(jnp.where(onehot, x, 0.0), axis=0, keepdims=True)
        # TODO(synk): offload this class-weight gather to the idle MXU
        # (w (1,C) @ onehot (C,T)) once tiny-K matmuls are validated to lower.
        w_sel = jnp.sum(jnp.where(onehot, w_plane, 0.0), axis=0, keepdims=True)
        if with_logits:
            m = jnp.max(x, axis=0, keepdims=True)
            lse = m + jnp.log(jnp.sum(jnp.exp(x - m), axis=0, keepdims=True))
            per_elem = lse - picked
        else:
            per_elem = -picked
        if need_mask:
            per_elem = jnp.where(valid, per_elem, 0.0)
            w_sel = jnp.where(valid, w_sel, 0.0)
        loss_sum = loss_sum + w_sel * per_elem
        w_sum = w_sum + w_sel

    acc_ref[...] += loss_sum
    wacc_ref[...] += w_sum

    @pl.when(s == pl.num_programs(1) - 1)
    def _finish():
        num_ref[...] = jnp.broadcast_to(jnp.sum(acc_ref[...]), (1, _LANE))
        den_ref[...] = jnp.broadcast_to(jnp.sum(wacc_ref[...]), (1, _LANE))


def cross_entropy_loss(output, target, weight=None, with_logits=True):
    """output: (N, C, *spatial) float; target: (N, *spatial) int. Returns scalar f32."""
    N, C = int(output.shape[0]), int(output.shape[1])
    spatial = tuple(int(s) for s in output.shape[2:])
    HW = int(math.prod(spatial)) if spatial else 1

    # Free contiguous reshapes -- no NCHW transpose, no padding copy.
    x = output.reshape(N, C, HW)
    tgt = target.reshape(N, 1, HW).astype(jnp.int32)

    budget, vmem_limit = _vmem_limits()
    nb, tile_hw = _choose_tiles(N, C, HW, jnp.dtype(output.dtype).itemsize, budget)
    num_nb = N // nb
    num_s = -(-HW // tile_hw)
    need_mask = (HW % tile_hw) != 0          # ragged tail handled by in-kernel mask

    grid = (num_nb, num_s)
    x_spec = pl.BlockSpec((nb, C, tile_hw), lambda n, s: (n, 0, s))
    t_spec = pl.BlockSpec((nb, 1, tile_hw), lambda n, s: (n, 0, s))
    out_spec = pl.BlockSpec((1, _LANE), lambda n, s: (0, n))

    compiler_params = pltpu.CompilerParams(
        dimension_semantics=("parallel", "arbitrary"),   # n-blocks split across v7x TCs
        vmem_limit_bytes=vmem_limit,
    )

    if weight is None:
        kernel = functools.partial(
            _ce_kernel_unweighted, nb=nb, with_logits=with_logits,
            hw=HW, tile_hw=tile_hw, need_mask=need_mask)
        partials = pl.pallas_call(
            kernel,
            out_shape=jax.ShapeDtypeStruct((1, num_nb * _LANE), jnp.float32),
            grid_spec=pltpu.PrefetchScalarGridSpec(
                num_scalar_prefetch=0,
                grid=grid,
                in_specs=[x_spec, t_spec],
                out_specs=out_spec,
                scratch_shapes=[pltpu.VMEM((1, tile_hw), jnp.float32)],
            ),
            compiler_params=compiler_params,
        )(x, tgt)
        total = jnp.sum(partials.reshape(num_nb, _LANE)[:, 0])
        return total / jnp.float32(N * HW)

    w = jnp.asarray(weight, jnp.float32).reshape(C, 1)
    w_spec = pl.BlockSpec((C, 1), lambda n, s: (0, 0))
    kernel = functools.partial(
        _ce_kernel_weighted, nb=nb, with_logits=with_logits,
        hw=HW, tile_hw=tile_hw, need_mask=need_mask)
    num_p, den_p = pl.pallas_call(
        kernel,
        out_shape=(jax.ShapeDtypeStruct((1, num_nb * _LANE), jnp.float32),
                   jax.ShapeDtypeStruct((1, num_nb * _LANE), jnp.float32)),
        grid_spec=pltpu.PrefetchScalarGridSpec(
            num_scalar_prefetch=0,
            grid=grid,
            in_specs=[x_spec, t_spec, w_spec],
            out_specs=[out_spec, out_spec],
            scratch_shapes=[pltpu.VMEM((1, tile_hw), jnp.float32),
                            pltpu.VMEM((1, tile_hw), jnp.float32)],
        ),
        compiler_params=compiler_params,
    )(x, tgt, w)
    num = jnp.sum(num_p.reshape(num_nb, _LANE)[:, 0])
    den = jnp.sum(den_p.reshape(num_nb, _LANE)[:, 0])
    return num / den


class CrossEntropyLossWrapper:
    """JAX/Pallas port of the PyTorch CrossEntropyLossWrapper (reduction='mean')."""

    def __init__(self, with_logits=True, weight=None, **kwargs):
        self.with_logits = with_logits
        self.weight = None if weight is None else jnp.asarray(weight, jnp.float32)
        # TODO(synk): ignore_index (torch default -100), label_smoothing and
        # reduction != 'mean' from torch.nn.CrossEntropyLoss are not implemented.

    def __call__(self, output, target):
        return cross_entropy_loss(
            output, target, weight=self.weight, with_logits=self.with_logits)

    def get_name(self):
        return "CELoss"


if __name__ == "__main__":
    key = jax.random.PRNGKey(0)
    k1, k2, k3, k4, k5, k6 = jax.random.split(key, 6)

    # 1) logits path, no weight (torch.nn.CrossEntropyLoss defaults)
    N, C, H, W = 2, 4, 16, 16
    logits = jax.random.normal(k1, (N, C, H, W), dtype=jnp.float32)
    target = jax.random.randint(k2, (N, H, W), 0, C, dtype=jnp.int32)

    loss = jax.block_until_ready(CrossEntropyLossWrapper(with_logits=True)(logits, target))
    logp = jax.nn.log_softmax(logits, axis=1)
    ref = -jnp.mean(jnp.take_along_axis(logp, target[:, None, :, :], axis=1))
    assert jnp.allclose(loss, ref, rtol=1e-5, atol=1e-5), (loss, ref)

    # 2) per-class weights (weighted-mean semantics)
    w_list = [0.5, 1.0, 2.0, 1.5]
    loss_w = jax.block_until_ready(
        CrossEntropyLossWrapper(with_logits=True, weight=w_list)(logits, target))
    w_arr = jnp.asarray(w_list, jnp.float32)
    nll = -jnp.take_along_axis(logp, target[:, None, :, :], axis=1)[:, 0]
    wt = w_arr[target]
    ref_w = jnp.sum(wt * nll) / jnp.sum(wt)
    assert jnp.allclose(loss_w, ref_w, rtol=1e-5, atol=1e-5), (loss_w, ref_w)

    # 3) NLL path (with_logits=False) on a ragged spatial size (exercises the
    #    boundary-block column mask -- no padding copy any more)
    H2, W2 = 15, 15
    logits2 = jax.random.normal(k3, (N, C, H2, W2), dtype=jnp.float32)
    target2 = jax.random.randint(k4, (N, H2, W2), 0, C, dtype=jnp.int32)
    logp2 = jax.nn.log_softmax(logits2, axis=1)
    loss_nll = jax.block_until_ready(
        CrossEntropyLossWrapper(with_logits=False)(logp2, target2))
    ref_nll = -jnp.mean(jnp.take_along_axis(logp2, target2[:, None, :, :], axis=1))
    assert jnp.allclose(loss_nll, ref_nll, rtol=1e-5, atol=1e-5), (loss_nll, ref_nll)

    # 4) multi n-block "parallel" axis + multiple (ragged) spatial tiles + Nb batching
    N3, C3, H3, W3 = 16, 3, 48, 48
    logits3 = jax.random.normal(k5, (N3, C3, H3, W3), dtype=jnp.float32)
    target3 = jax.random.randint(k6, (N3, H3, W3), 0, C3, dtype=jnp.int32)
    loss3 = jax.block_until_ready(CrossEntropyLossWrapper(with_logits=True)(logits3, target3))
    logp3 = jax.nn.log_softmax(logits3, axis=1)
    ref3 = -jnp.mean(jnp.take_along_axis(logp3, target3[:, None, :, :], axis=1))
    assert jnp.allclose(loss3, ref3, rtol=1e-4, atol=1e-5), (loss3, ref3)

    print("KERNEL_OK")
</pallas_src>

<mosaic_0001>
module attributes {stable_mosaic.version = 11 : i64} {
  func.func @_ce_kernel_unweighted(%arg0: i32, %arg1: i32, %arg2: memref<2x4x256xf32, #tpu.memory_space<vmem>>, %arg3: memref<2x1x256xi32, #tpu.memory_space<vmem>>, %arg4: memref<1x128xf32, #tpu.memory_space<vmem>>, %arg5: memref<1x256xf32, #tpu.memory_space<vmem>>) attributes {dimension_semantics = [#tpu.dimension_semantics<parallel>, #tpu.dimension_semantics<arbitrary>], iteration_bounds = array<i64: 1, 1>, scalar_prefetch = 0 : i64, scratch_operands = 1 : i64, tpu.core_type = #tpu.core_type<tc>, window_params = [{transform_indices = @transform_0, window_bounds = array<i64: 2, 4, 256>}, {transform_indices = @transform_1, window_bounds = array<i64: 2, 1, 256>}, {transform_indices = @transform_2, window_bounds = array<i64: 1, 128>}]} {
    %c0_i32 = arith.constant 0 : i32
    %0 = arith.cmpi eq, %arg1, %c0_i32 : i32
    %1 = arith.extui %0 : i1 to i32
    %c0_i32_0 = arith.constant 0 : i32
    %2 = arith.cmpi ne, %1, %c0_i32_0 : i32
    scf.if %2 {
      %cst_25 = arith.constant 0.000000e+00 : f32
      %53 = vector.broadcast %cst_25 : f32 to vector<1x256xf32>
      %c0_26 = arith.constant 0 : index
      %c0_27 = arith.constant 0 : index
      %54 = vector.load %arg5[%c0_26, %c0_27] : memref<1x256xf32, #tpu.memory_space<vmem>>, vector<1x256xf32>
      tpu.vector_store %arg5[%c0_26, %c0_27], %53 {strides = array<i32>} : memref<1x256xf32, #tpu.memory_space<vmem>>, vector<1x256xf32>,
    } else {
    }
    %3 = tpu.iota {dimensions = array<i32: 0>} : vector<4x256xi32>
    %cst = arith.constant 0.000000e+00 : f32
    %4 = vector.broadcast %cst : f32 to vector<1x256xf32>
    %c0 = arith.constant 0 : index
    %c0_1 = arith.constant 0 : index
    %c0_2 = arith.constant 0 : index
    %5 = vector.load %arg2[%c0, %c0_1, %c0_2] : memref<2x4x256xf32, #tpu.memory_space<vmem>>, vector<1x4x256xf32>
    %6 = vector.shape_cast %5 : vector<1x4x256xf32> to vector<4x256xf32>
    %c0_3 = arith.constant 0 : index
    %c0_4 = arith.constant 0 : index
    %c0_5 = arith.constant 0 : index
    %7 = vector.load %arg3[%c0_3, %c0_4, %c0_5] : memref<2x1x256xi32, #tpu.memory_space<vmem>>, vector<1x1x256xi32>
    %8 = vector.shape_cast %7 : vector<1x1x256xi32> to vector<1x256xi32>
    %9 = vector.broadcast %8 : vector<1x256xi32> to vector<4x256xi32>
    %10 = arith.cmpi eq, %3, %9 : vector<4x256xi32>
    %cst_6 = arith.constant 0.000000e+00 : f32
    %11 = vector.broadcast %cst_6 : f32 to vector<4x256xf32>
    %12 = arith.select %10, %6, %11 : vector<4x256xi1>, vector<4x256xf32>
    %cst_7 = arith.constant dense<0.000000e+00> : vector<256xf32>
    %13 = vector.multi_reduction <add>, %12, %cst_7 [0] : vector<4x256xf32> to vector<256xf32>
    %14 = vector.shape_cast %13 : vector<256xf32> to vector<1x256xf32>
    %cst_8 = arith.constant dense<0xFF800000> : vector<256xf32>
    %15 = vector.multi_reduction <maximumf>, %6, %cst_8 [0] : vector<4x256xf32> to vector<256xf32>
    %16 = vector.shape_cast %15 : vector<256xf32> to vector<1x256xf32>
    %17 = vector.broadcast %16 : vector<1x256xf32> to vector<4x256xf32>
    %18 = arith.subf %6, %17 : vector<4x256xf32>
    %19 = math.exp %18 : vector<4x256xf32>
    %cst_9 = arith.constant dense<0.000000e+00> : vector<256xf32>
    %20 = vector.multi_reduction <add>, %19, %cst_9 [0] : vector<4x256xf32> to vector<256xf32>
    %21 = vector.shape_cast %20 : vector<256xf32> to vector<1x256xf32>
    %22 = math.log %21 : vector<1x256xf32>
    %23 = arith.addf %16, %22 : vector<1x256xf32>
    %24 = arith.subf %23, %14 : vector<1x256xf32>
    %25 = arith.addf %4, %24 : vector<1x256xf32>
    %c1 = arith.constant 1 : index
    %c0_10 = arith.constant 0 : index
    %c0_11 = arith.constant 0 : index
    %26 = vector.load %arg2[%c1, %c0_10, %c0_11] : memref<2x4x256xf32, #tpu.memory_space<vmem>>, vector<1x4x256xf32>
    %27 = vector.shape_cast %26 : vector<1x4x256xf32> to vector<4x256xf32>
    %c1_12 = arith.constant 1 : index
    %c0_13 = arith.constant 0 : index
    %c0_14 = arith.constant 0 : index
    %28 = vector.load %arg3[%c1_12, %c0_13, %c0_14] : memref<2x1x256xi32, #tpu.memory_space<vmem>>, vector<1x1x256xi32>
    %29 = vector.shape_cast %28 : vector<1x1x256xi32> to vector<1x256xi32>
    %30 = vector.broadcast %29 : vector<1x256xi32> to vector<4x256xi32>
    %31 = arith.cmpi eq, %3, %30 : vector<4x256xi32>
    %cst_15 = arith.constant 0.000000e+00 : f32
    %32 = vector.broadcast %cst_15 : f32 to vector<4x256xf32>
    %33 = arith.select %31, %27, %32 : vector<4x256xi1>, vector<4x256xf32>
    %cst_16 = arith.constant dense<0.000000e+00> : vector<256xf32>
    %34 = vector.multi_reduction <add>, %33, %cst_16 [0] : vector<4x256xf32> to vector<256xf32>
    %35 = vector.shape_cast %34 : vector<256xf32> to vector<1x256xf32>
    %cst_17 = arith.constant dense<0xFF800000> : vector<256xf32>
    %36 = vector.multi_reduction <maximumf>, %27, %cst_17 [0] : vector<4x256xf32> to vector<256xf32>
    %37 = vector.shape_cast %36 : vector<256xf32> to vector<1x256xf32>
    %38 = vector.broadcast %37 : vector<1x256xf32> to vector<4x256xf32>
    %39 = arith.subf %27, %38 : vector<4x256xf32>
    %40 = math.exp %39 : vector<4x256xf32>
    %cst_18 = arith.constant dense<0.000000e+00> : vector<256xf32>
    %41 = vector.multi_reduction <add>, %40, %cst_18 [0] : vector<4x256xf32> to vector<256xf32>
    %42 = vector.shape_cast %41 : vector<256xf32> to vector<1x256xf32>
    %43 = math.log %42 : vector<1x256xf32>
    %44 = arith.addf %37, %43 : vector<1x256xf32>
    %45 = arith.subf %44, %35 : vector<1x256xf32>
    %46 = arith.addf %25, %45 : vector<1x256xf32>
    %c0_19 = arith.constant 0 : index
    %c0_20 = arith.constant 0 : index
    %47 = vector.load %arg5[%c0_19, %c0_20] : memref<1x256xf32, #tpu.memory_space<vmem>>, vector<1x256xf32>
    %48 = arith.addf %47, %46 : vector<1x256xf32>
    %c0_21 = arith.constant 0 : index
    %c0_22 = arith.constant 0 : index
    %49 = vector.load %arg5[%c0_21, %c0_22] : memref<1x256xf32, #tpu.memory_space<vmem>>, vector<1x256xf32>
    tpu.vector_store %arg5[%c0_21, %c0_22], %48 {strides = array<i32>} : memref<1x256xf32, #tpu.memory_space<vmem>>, vector<1x256xf32>,
    %c0_i32_23 = arith.constant 0 : i32
    %50 = arith.cmpi eq, %arg1, %c0_i32_23 : i32
    %51 = arith.extui %50 : i1 to i32
    %c0_i32_24 = arith.constant 0 : i32
    %52 = arith.cmpi ne, %51, %c0_i32_24 : i32
    scf.if %52 {
      %c0_25 = arith.constant 0 : index
      %c0_26 = arith.constant 0 : index
      %53 = vector.load %arg5[%c0_25, %c0_26] : memref<1x256xf32, #tpu.memory_space<vmem>>, vector<1x256xf32>
      %54 = vector.shape_cast %53 : vector<1x256xf32> to vector<1x1x256xf32>
      %cst_27 = arith.constant dense<0.000000e+00> : vector<1xf32>
      %55 = vector.multi_reduction <add>, %54, %cst_27 [1, 2] : vector<1x1x256xf32> to vector<1xf32>
      %56 = vector.shape_cast %55 : vector<1xf32> to vector<1x1x1xf32>
      %57 = vector.extract %56[0, 0, 0] : f32 from vector<1x1x1xf32>
      %58 = vector.broadcast %57 : f32 to vector<1x128xf32>
      %c0_28 = arith.constant 0 : index
      %c0_29 = arith.constant 0 : index
      %59 = vector.load %arg4[%c0_28, %c0_29] : memref<1x128xf32, #tpu.memory_space<vmem>>, vector<1x128xf32>
      tpu.vector_store %arg4[%c0_28, %c0_29], %58 {strides = array<i32>} : memref<1x128xf32, #tpu.memory_space<vmem>>, vector<1x128xf32>,
    } else {
    }
    return
  }
  func.func @transform_0(%arg0: i32, %arg1: i32) -> (i32, i32, i32) {
    %c0_i32 = arith.constant 0 : i32
    %c0_i32_0 = arith.constant 0 : i32
    return %arg0, %c0_i32, %arg1 : i32, i32, i32
  }
  func.func @transform_1(%arg0: i32, %arg1: i32) -> (i32, i32, i32) {
    %c0_i32 = arith.constant 0 : i32
    %c0_i32_0 = arith.constant 0 : i32
    return %arg0, %c0_i32, %arg1 : i32, i32, i32
  }
  func.func @transform_2(%arg0: i32, %arg1: i32) -> (i32, i32) {
    %c0_i32 = arith.constant 0 : i32
    %c0_i32_0 = arith.constant 0 : i32
    return %c0_i32, %arg0 : i32, i32
  }
}

</mosaic_0001>

<llo_original>
// kernel: tpu_custom_call.1
$region0: #{tpu_custom_call.1}
  #allocation0 [shape = 'u32[]', space=smem, size = 0x4, offset = 0x4, fixed_abs, tag = 'smem constant byte address 0x4 - core index']
  #allocation1 [shape = 'u32[144,128]{1,0:T(1,128)}', space=vmem, size = 0x12000, scoped, tag = 'internal scratch']
  #allocation2 [shape = 'f32[1,256]{1,0:T(1,128)}', space=vmem, size = 0x400, scoped, tag = 'scratch operand']
  %s0 = inlined_call_operand.hbm [shape: f32[2,4,256], index: 0, kind: input, shape index: {}]
  %s1 = inlined_call_operand.hbm [shape: s32[2,1,256], index: 1, kind: input, shape index: {}]
  %s2 = inlined_call_operand.hbm [shape: f32[1,128], index: 2, kind: output, shape index: {}]
  %s3 = sld [smem:[#allocation0]]
  $region34: #{tpu_custom_call.1} parent=0
    _
  %s5 = ssub.s32 1, %s3
  %s6 = scalar_select 0, %s5, %s3
  $region1: #{tpu_custom_call.1} parent=0
    #allocation3 [shape = 'u8[8192]{0}', space=vmem, size = 0x2000, scoped, tag = 'input window, operand 0, single buffered']
    #allocation4 [shape = 's32[1]{0}', space=sflag, size = 0x4, scoped, tag = 'scoped memory for tpu_custom_call.1']
    #allocation5 [shape = 's32[1]{0}', space=sflag, size = 0x4, scoped, tag = 'scoped memory for tpu_custom_call.1']
    #allocation6 [shape = 'u8[2048]{0}', space=vmem, size = 0x800, scoped, tag = 'input window, operand 1, single buffered']
    #allocation7 [shape = 's32[1]{0}', space=sflag, size = 0x4, scoped, tag = 'scoped memory for tpu_custom_call.1']
    #allocation8 [shape = 'u8[512]{0}', space=vmem, size = 0x400, scoped, tag = 'output window, operand 0, single buffered']
    %7 = vsyncpa [#allocation4], 0
    %8 = vsyncpa [#allocation7], 0
    %9 = vsyncpa [#allocation5], 0
    // Predicated region
    $region2: #{tpu_custom_call.1} parent=1 // pred_check
      _
    $region3: #{tpu_custom_call.1} parent=1 // pred_check_branch
      %11 = sbr.rel (0) target = $region5
    $region4: #{tpu_custom_call.1} parent=1 // pred_region
      %s13 = ssub.s32 256, 256
      %14 = vsyncadd [#allocation4], %s13
      %s15 = sshll.u32 [#allocation3], 4
      %s16 = int_to_ptr.vmem [resolvable:$true] %s15
      %21 = dma.hbm_to_vmem [thread:$0]  %s0, 256, %s16, [#allocation4], 128, 128, 8
    $region5: #{tpu_custom_call.1} parent=1 // pred_fallthru
      _
    // Predicated region
    $region6: #{tpu_custom_call.1} parent=1 // pred_check
      _
    $region7: #{tpu_custom_call.1} parent=1 // pred_check_branch
      %23 = sbr.rel (0) target = $region9
    $region8: #{tpu_custom_call.1} parent=1 // pred_region
      %s25 = ssub.s32 64, 64
      %26 = vsyncadd [#allocation7], %s25
      %s27 = sshll.u32 [#allocation6], 4
      %s28 = int_to_ptr.vmem [resolvable:$true] %s27
      %33 = dma.hbm_to_vmem [thread:$0]  %s1, 64, %s28, [#allocation7], 32, 32, 2
    $region9: #{tpu_custom_call.1} parent=1 // pred_fallthru
      _
    // Predicated region
    $region10: #{tpu_custom_call.1} parent=1 // pred_check
      _
    $region11: #{tpu_custom_call.1} parent=1 // pred_check_branch
      %35 = sbr.rel (0) target = $region13
    $region12: #{tpu_custom_call.1} parent=1 // pred_region
      %36 = dma.done [#allocation4], 256
    $region13: #{tpu_custom_call.1} parent=1 // pred_fallthru
      _
    // Predicated region
    $region14: #{tpu_custom_call.1} parent=1 // pred_check
      _
    $region15: #{tpu_custom_call.1} parent=1 // pred_check_branch
      %38 = sbr.rel (0) target = $region17
    $region16: #{tpu_custom_call.1} parent=1 // pred_region
      %39 = dma.done [#allocation7], 64
    $region17: #{tpu_custom_call.1} parent=1 // pred_fallthru
      _
    %p40 = scmp.eq.s32.totalorder 0, 0
    // Predicated region
    $region18: #{tpu_custom_call.1} parent=1 // pred_check
      %p41 = pneg %p40
    $region19: #{tpu_custom_call.1} parent=1 // pred_check_branch
      %43 = sbr.rel (%p41) target = $region21
    $region20: #{tpu_custom_call.1} parent=1 // pred_region
      %v44 = vlaneseq
      %vm45 = vcmp.ge.s32.totalorder %v44, 0
      %vm46 = vcmp.lt.s32.totalorder %v44, 256
      %vm47 = vmand %vm45, %vm46
      %48 = vst.msk [vmem:[#allocation2] sm:$0x3] %vm47, 0.0
    $region21: #{tpu_custom_call.1} parent=1 // pred_fallthru
      _
    %v49 = vlaneseq
    %v50 = vshrl.u32 %v49, 7
    %v51 = vld [vmem:[#allocation3] sm:$0xff]
    %v52 = vld [vmem:[#allocation6] sm:$0x3]
    %v53 = vlaneseq
    %v54 = vshrl.u32 %v53, 7
    %v55 = vsub.s32 0, %v54
    %v56 = vrot.slane %v52, %v55
    %v57 = vlaneseq
    %v58 = vshrl.u32 %v57, 7
    %v59 = vsub.s32 1, %v58
    %v60 = vrot.slane %v52, %v59
    %vm61 = vcmp.eq.s32.totalorder %v50, %v56
    %vm62 = vcmp.eq.s32.totalorder %v50, %v60
    %v64 = vcombine.high %v51, %v51
    %v66 = vsel %vm61, %v51, 0.0
    %v67 = vsel %vm62, %v64, 0.0
    %vm68 = vcmask 1043456
    %v69 = vsel %vm68, %v66, 0.0
    %v70 = vrot.slane %v69, 4
    %v71 = vadd.f32 %v69, %v70
    %v72 = vrot.slane %v71, 2
    %v73 = vadd.f32 %v71, %v72
    %v74 = vrot.slane %v73, 1
    %v75 = vadd.f32 %v73, %v74
    %v76 = vsel %vm68, %v67, 0.0
    %v77 = vrot.slane %v76, 4
    %v78 = vadd.f32 %v76, %v77
    %v79 = vrot.slane %v78, 2
    %v80 = vadd.f32 %v78, %v79
    %v81 = vrot.slane %v80, 1
    %v82 = vadd.f32 %v80, %v81
    %v83 = vsel %vm68, %v51, -inf
    %v84 = vrot.slane %v83, 4
    %v85 = vmax.f32 %v83, %v84
    %v86 = vrot.slane %v85, 2
    %v87 = vmax.f32 %v85, %v86
    %v88 = vrot.slane %v87, 1
    %v89 = vmax.f32 %v87, %v88
    %v90 = vsel %vm68, %v64, -inf
    %v91 = vrot.slane %v90, 4
    %v92 = vmax.f32 %v90, %v91
    %v93 = vrot.slane %v92, 2
    %v94 = vmax.f32 %v92, %v93
    %v95 = vrot.slane %v94, 1
    %v96 = vmax.f32 %v94, %v95
    %v99 = vcombine.low %v89, %v96
    %v101 = vsub.f32 %v51, %v99
    %v102 = vmul.f32 %v101, 1.442695
    %v103 = vpow.pop %v102
    %v105 = vcombine.high %v103, %v103
    %v107 = vsel %vm68, %v103, 0.0
    %v108 = vrot.slane %v107, 4
    %v109 = vadd.f32 %v107, %v108
    %v110 = vrot.slane %v109, 2
    %v111 = vadd.f32 %v109, %v110
    %v112 = vrot.slane %v111, 1
    %v113 = vadd.f32 %v111, %v112
    %v114 = vsel %vm68, %v105, 0.0
    %v115 = vrot.slane %v114, 4
    %v116 = vadd.f32 %v114, %v115
    %v117 = vrot.slane %v116, 2
    %v118 = vadd.f32 %v116, %v117
    %v119 = vrot.slane %v118, 1
    %v120 = vadd.f32 %v118, %v119
    %v121 = vlog2.pop %v113
    %v122 = vmul.f32 %v121, 0.6931472
    %v123 = vlog2.pop %v120
    %v124 = vmul.f32 %v123, 0.6931472
    %v125 = vadd.f32 %v89, %v122
    %v126 = vadd.f32 %v96, %v124
    %v127 = vsub.f32 %v125, %v75
    %v128 = vsub.f32 %v126, %v82
    %v129 = vadd.f32 %v127, 0.0
    %v130 = vadd.f32 %v128, 0.0
    %s131 = scalar_lea.vmem [#allocation3], 8
    %v132 = vld [vmem:[%s131] sm:$0xff]
    %s133 = scalar_lea.vmem [#allocation6], 2
    %v134 = vld [vmem:[%s133] sm:$0x3]
    %v135 = vlaneseq
    %v136 = vshrl.u32 %v135, 7
    %v137 = vsub.s32 0, %v136
    %v138 = vrot.slane %v134, %v137
    %v139 = vlaneseq
    %v140 = vshrl.u32 %v139, 7
    %v141 = vsub.s32 1, %v140
    %v142 = vrot.slane %v134, %v141
    %vm143 = vcmp.eq.s32.totalorder %v50, %v138
    %vm144 = vcmp.eq.s32.totalorder %v50, %v142
    %v146 = vcombine.high %v132, %v132
    %v148 = vsel %vm143, %v132, 0.0
    %v149 = vsel %vm144, %v146, 0.0
    %v150 = vsel %vm68, %v148, 0.0
    %v151 = vrot.slane %v150, 4
    %v152 = vadd.f32 %v150, %v151
    %v153 = vrot.slane %v152, 2
    %v154 = vadd.f32 %v152, %v153
    %v155 = vrot.slane %v154, 1
    %v156 = vadd.f32 %v154, %v155
    %v157 = vsel %vm68, %v149, 0.0
    %v158 = vrot.slane %v157, 4
    %v159 = vadd.f32 %v157, %v158
    %v160 = vrot.slane %v159, 2
    %v161 = vadd.f32 %v159, %v160
    %v162 = vrot.slane %v161, 1
    %v163 = vadd.f32 %v161, %v162
    %v164 = vsel %vm68, %v132, -inf
    %v165 = vrot.slane %v164, 4
    %v166 = vmax.f32 %v164, %v165
    %v167 = vrot.slane %v166, 2
    %v168 = vmax.f32 %v166, %v167
    %v169 = vrot.slane %v168, 1
    %v170 = vmax.f32 %v168, %v169
    %v171 = vsel %vm68, %v146, -inf
    %v172 = vrot.slane %v171, 4
    %v173 = vmax.f32 %v171, %v172
    %v174 = vrot.slane %v173, 2
    %v175 = vmax.f32 %v173, %v174
    %v176 = vrot.slane %v175, 1
    %v177 = vmax.f32 %v175, %v176
    %v180 = vcombine.low %v170, %v177
    %v182 = vsub.f32 %v132, %v180
    %v183 = vmul.f32 %v182, 1.442695
    %v184 = vpow.pop %v183
    %v186 = vcombine.high %v184, %v184
    %v188 = vsel %vm68, %v184, 0.0
    %v189 = vrot.slane %v188, 4
    %v190 = vadd.f32 %v188, %v189
    %v191 = vrot.slane %v190, 2
    %v192 = vadd.f32 %v190, %v191
    %v193 = vrot.slane %v192, 1
    %v194 = vadd.f32 %v192, %v193
    %v195 = vsel %vm68, %v186, 0.0
    %v196 = vrot.slane %v195, 4
    %v197 = vadd.f32 %v195, %v196
    %v198 = vrot.slane %v197, 2
    %v199 = vadd.f32 %v197, %v198
    %v200 = vrot.slane %v199, 1
    %v201 = vadd.f32 %v199, %v200
    %v202 = vlog2.pop %v194
    %v203 = vmul.f32 %v202, 0.6931472
    %v204 = vlog2.pop %v201
    %v205 = vmul.f32 %v204, 0.6931472
    %v206 = vadd.f32 %v170, %v203
    %v207 = vadd.f32 %v177, %v205
    %v208 = vsub.f32 %v206, %v156
    %v209 = vsub.f32 %v207, %v163
    %v210 = vadd.f32 %v129, %v208
    %v211 = vadd.f32 %v130, %v209
    %v212 = vld [vmem:[#allocation2] sm:$0x3]
    %v215 = vcombine.low %v210, %v211
    %v217 = vunpack.c.l.s4 1966171168
    %v218 = vunpack.c.0.s8 %v217
    %v219 = vlaneseq
    %v220 = vshrl.u32 %v219, 7
    %v221 = vsub.s32 %v218, %v220
    %v222 = vrot.slane %v215, %v221
    %v224 = vunpack.c.l.s4 1966171168
    %v225 = vunpack.c.0.s8 %v224
    %v226 = vlaneseq
    %v227 = vshrl.u32 %v226, 7
    %v228 = vsub.s32 %v225, %v227
    %v229 = vrot.slane %v222, %v228
    %v231 = vadd.f32 %v212, %v229
    %v232 = vlaneseq
    %vm233 = vcmp.ge.s32.totalorder %v232, 0
    %vm234 = vcmp.lt.s32.totalorder %v232, 256
    %vm235 = vmand %vm233, %vm234
    %236 = vst.msk [vmem:[#allocation2] sm:$0x3] %vm235, %v231
    // Predicated region
    $region22: #{tpu_custom_call.1} parent=1 // pred_check
      %p237 = pneg %p40
    $region23: #{tpu_custom_call.1} parent=1 // pred_check_branch
      %239 = sbr.rel (%p237) target = $region25
    $region24: #{tpu_custom_call.1} parent=1 // pred_region
      %v240 = vld [vmem:[#allocation2] sm:$0x3]
      %v242 = vlaneseq
      %v243 = vshrl.u32 %v242, 7
      %v244 = vsub.s32 0, %v243
      %v245 = vrot.slane %v240, %v244
      %v246 = vlaneseq
      %v247 = vshrl.u32 %v246, 7
      %v248 = vsub.s32 1, %v247
      %v249 = vrot.slane %v240, %v248
      %vm252 = vcmask 1040384
      %v253 = vsel %vm252, %v245, 0.0
      %v254 = vsel %vm252, %v249, 0.0
      %v255 = vadd.f32 %v253, %v254
      %256 = vadd.xlane.f32.xlu0 %v255
      %v257 = vpop.xlane.xlu0 %256
      %v258 = vrot.slane %v257, 4
      %v259 = vadd.f32 %v257, %v258
      %v260 = vrot.slane %v259, 2
      %v261 = vadd.f32 %v259, %v260
      %v262 = vrot.slane %v261, 1
      %v263 = vadd.f32 %v261, %v262
      %s264 = vtos %v263
      %v265 = vstv %s264
      %266 = vst [vmem:[#allocation8] sm:$0x1] %v265
    $region25: #{tpu_custom_call.1} parent=1 // pred_fallthru
      _
    // Predicated region
    $region26: #{tpu_custom_call.1} parent=1 // pred_check
      _
    $region27: #{tpu_custom_call.1} parent=1 // pred_check_branch
      %268 = sbr.rel (0) target = $region29
    $region28: #{tpu_custom_call.1} parent=1 // pred_region
      %s270 = ssub.s32 16, 16
      %271 = vsyncadd [#allocation5], %s270
      %s273 = sshll.u32 [#allocation8], 4
      %s274 = int_to_ptr.vmem [resolvable:$true] %s273
      %276 = dma.vmem_to_hbm [thread:$0]  %s274, 16, %s2, [#allocation5]
    $region29: #{tpu_custom_call.1} parent=1 // pred_fallthru
      _
    // Predicated region
    $region30: #{tpu_custom_call.1} parent=1 // pred_check
      _
    $region31: #{tpu_custom_call.1} parent=1 // pred_check_branch
      %278 = sbr.rel (0) target = $region33
    $region32: #{tpu_custom_call.1} parent=1 // pred_region
      %279 = dma.done [#allocation5], 16
    $region33: #{tpu_custom_call.1} parent=1 // pred_fallthru
      _
    %280 = vsyncpa [#allocation4], 1
    %281 = vsyncpa [#allocation7], 1
    %282 = vsyncpa [#allocation5], 1

</llo_original>
